<compile_context>
chip_gen: v7x
topology: tpu7x:2x2x1
jax: 0.10.0
libtpu: 0.0.40
codegen_flags: <defaults>
</compile_context>

<pallas_src>
import numpy as np
import jax
import jax.numpy as jnp
from jax.experimental import pallas as pl
from jax.experimental.pallas import tpu as pltpu


def _layer_kernel(w_ref, bias_ref, x_ref, s_ref, base_ref,
                  under_ibf_ref, over_ibf_ref, under_deg_ref, over_deg_ref):
    w = w_ref[...]                    # (TL, K)      signed weights
    bias = bias_ref[...]              # (TL, 1)
    x_cat = x_ref[...]                # (2K, n+1)    [x_over ; x_under]
    s_scaled = s_ref[...]             # (n+1, F)     L-invariant IBF scatter matrix
    base_masked = base_ref[...]       # (1, F)       L-invariant IBF background

    tl, k = w.shape
    n_p1 = x_cat.shape[1]
    n = n_p1 - 1

    # Split signed weights in-kernel (weights travel HBM->VMEM only once).
    w_pos = jnp.maximum(w, 0.0)
    w_neg = jnp.minimum(w, 0.0)       # == -relu(-w)

    x_over = x_cat[:k]                # static, sublane-aligned slices (k % 8 == 0)
    x_under = x_cat[k:]

    # ---- all-zero early-out flags (ibf_tensor_prod_input_weights) ----
    def _allzero_full(x):             # -> (1, 1) bool
        m = jnp.max(jnp.abs(x), axis=1, keepdims=True)
        return jnp.max(m, axis=0, keepdims=True) == 0.0

    zin_over = _allzero_full(x_over)
    zin_under = _allzero_full(x_under)
    zw_pos = jnp.max(jnp.abs(w_pos), axis=1, keepdims=True) == 0.0   # (TL, 1)
    zw_neg = jnp.max(jnp.abs(w_neg), axis=1, keepdims=True) == 0.0

    z_u1 = jnp.logical_or(zw_neg, zin_over)    # under term 1: (x_over,  w_neg)
    z_u2 = jnp.logical_or(zw_pos, zin_under)   # under term 2: (x_under, w_pos)
    z_o1 = jnp.logical_or(zw_pos, zin_over)    # over  term 1: (x_over,  w_pos)
    z_o2 = jnp.logical_or(zw_neg, zin_under)   # over  term 2: (x_under, w_neg)

    deg_under = jnp.logical_or(~z_u1, ~z_u2).astype(jnp.float32)     # (TL, 1)
    deg_over = jnp.logical_or(~z_o1, ~z_o2).astype(jnp.float32)
    under_deg_ref[...] = jnp.broadcast_to(deg_under, (tl, n))
    over_deg_ref[...] = jnp.broadcast_to(deg_over, (tl, n))

    # ---- ONE fused MXU matmul for all four node/input products + both sums ----
    #   rows [0:TL)   -> w_neg@x_over + w_pos@x_under   (under coeffs)
    #   rows [TL:2TL) -> w_pos@x_over + w_neg@x_under   (over  coeffs)
    w_under = jnp.concatenate([w_neg, w_pos], axis=1)                 # (TL, 2K)
    w_over = jnp.concatenate([w_pos, w_neg], axis=1)                  # (TL, 2K)
    w_big = jnp.concatenate([w_under, w_over], axis=0)                # (2TL, 2K)
    mm = jnp.dot(w_big, x_cat, preferred_element_type=jnp.float32)    # (2TL, n+1)

    # Bias: torch's `coeffs[-1] += bias` selects the only ROW of the (1, n+1)
    # matmul result (bias added to every coefficient) except when BOTH terms hit
    # the all-zero early-out (1-D result) where only the last entry gets it.
    col = jax.lax.broadcasted_iota(jnp.int32, (tl, n_p1), 1)
    last_col = col == n
    both_zero_u = jnp.logical_and(z_u1, z_u2)                         # (TL, 1)
    both_zero_o = jnp.logical_and(z_o1, z_o2)
    add_u = jnp.where(jnp.logical_or(~both_zero_u, last_col), bias, 0.0)
    add_o = jnp.where(jnp.logical_or(~both_zero_o, last_col), bias, 0.0)
    coeffs = mm + jnp.concatenate([add_u, add_o], axis=0)             # (2TL, n+1)

    # ---- generate_linear_ibf, lane-dense flat layout f = i*(2n) + 2j + c ----
    #   out[l, f] = base[f] * coeffs[l, i(f)]   where variable-row j(f) == 0
    #             = base[f]                     otherwise (node-invariant)
    # realized as one small MXU scatter: coeffs @ S_scaled + base_masked.
    out = jnp.dot(coeffs, s_scaled, preferred_element_type=jnp.float32) + base_masked
    under_ibf_ref[...] = out[:tl]
    over_ibf_ref[...] = out[tl:]


def _pick_tile_l(L, n_vars, in_dim, vmem_budget_bytes=24 * 1024 * 1024):
    """Largest multiple-of-8 L-tile whose double-buffered tiles stay in budget
    (budget kept conservative so the same choice is safe on v7x's 64 MiB VMEM)."""
    F = (n_vars + 1) * n_vars * 2
    per_row = 4 * (in_dim + 1 + 2 * F + 2 * n_vars) * 2   # x2: double buffering
    tl = vmem_budget_bytes // max(per_row, 1)
    tl = max(8, min(128, (tl // 8) * 8))
    return int(min(tl, ((L + 7) // 8) * 8))


def _ibf_basis(intervals, n_vars):
    """Hoisted, node-invariant generate_linear_ibf pattern (tiny, depends only on
    intervals).  Flat index f = i*(2*n) + 2*j + c  (term i, variable row j, col c)."""
    n = n_vars
    F = (n + 1) * n * 2
    f = jnp.arange(F)
    i_f = f // (2 * n)
    j_f = (f % (2 * n)) // 2
    c_f = f % 2
    base = jnp.where(i_f == j_f, intervals[j_f, c_f], 1.0).astype(jnp.float32)
    sel = (i_f[None, :] == jnp.arange(n + 1)[:, None]) & (j_f[None, :] == 0)
    s_scaled = jnp.where(sel, base[None, :], 0.0).astype(jnp.float32)     # (n+1, F)
    base_masked = jnp.where(j_f != 0, base, 0.0).reshape(1, F)            # (1, F)
    return s_scaled, base_masked


def layer_module_forward(layer_weights, layer_biases, intervals,
                         layer_inputs_under, layer_inputs_over,
                         layer_inputs_under_degrees=None,
                         layer_inputs_over_degrees=None,
                         tile_l=None):
    """LayerModule.forward, activation='linear'.

    Returns (under_ibf, over_ibf, under_degrees, over_degrees):
      under/over_ibf : (layer_size, (n_vars+1)*n_vars, 2) -- under_ibf[k] equals the
                       per-node tensor the torch module returns in results_under[k]
      degrees        : (layer_size, n_vars)
    Degree inputs are unused on the linear path (exactly as in the torch module).
    """
    L, in_dim = layer_weights.shape
    n = int(intervals.shape[0])
    n_p1 = n + 1
    F = n_p1 * n * 2

    w = jnp.asarray(layer_weights, jnp.float32)
    bias2 = jnp.asarray(layer_biases, jnp.float32).reshape(L, 1)
    x_under = jnp.asarray(layer_inputs_under, jnp.float32)
    x_over = jnp.asarray(layer_inputs_over, jnp.float32)
    ivals = jnp.asarray(intervals, jnp.float32)

    # Shared, L-invariant operands (built once, outside the grid loop).
    x_cat = jnp.concatenate([x_over, x_under], axis=0)        # (2*in_dim, n+1)
    s_scaled, base_masked = _ibf_basis(ivals, n)

    TL = int(tile_l) if tile_l is not None else _pick_tile_l(L, n, in_dim)
    TL = max(8, (TL // 8) * 8)
    n_tiles = -(-L // TL)
    Lp = n_tiles * TL
    if Lp != L:                                   # zero-pad extra nodes; sliced off below
        w = jnp.pad(w, ((0, Lp - L), (0, 0)))
        bias2 = jnp.pad(bias2, ((0, Lp - L), (0, 0)))

    out_shape = (
        jax.ShapeDtypeStruct((Lp, F), jnp.float32),
        jax.ShapeDtypeStruct((Lp, F), jnp.float32),
        jax.ShapeDtypeStruct((Lp, n), jnp.float32),
        jax.ShapeDtypeStruct((Lp, n), jnp.float32),
    )

    flops = 2 * (2 * Lp) * (2 * in_dim) * n_p1 + 2 * (2 * Lp) * n_p1 * F
    bytes_accessed = 4 * (Lp * in_dim + Lp + 2 * in_dim * n_p1
                          + n_p1 * F + F + 2 * Lp * F + 2 * Lp * n)

    call = pl.pallas_call(
        _layer_kernel,
        grid=(n_tiles,),
        in_specs=[
            pl.BlockSpec((TL, in_dim), lambda i: (i, 0)),          # weights (L-tiled)
            pl.BlockSpec((TL, 1), lambda i: (i, 0)),               # bias    (L-tiled)
            pl.BlockSpec((2 * in_dim, n_p1), lambda i: (0, 0)),    # [x_over; x_under] (shared)
            pl.BlockSpec((n_p1, F), lambda i: (0, 0)),             # S_scaled (shared)
            pl.BlockSpec((1, F), lambda i: (0, 0)),                # base_masked (shared)
        ],
        out_specs=(
            pl.BlockSpec((TL, F), lambda i: (i, 0)),
            pl.BlockSpec((TL, F), lambda i: (i, 0)),
            pl.BlockSpec((TL, n), lambda i: (i, 0)),
            pl.BlockSpec((TL, n), lambda i: (i, 0)),
        ),
        out_shape=out_shape,
        compiler_params=pltpu.CompilerParams(
            dimension_semantics=("parallel",),        # v7x: 2 TCs split the L tiles
            vmem_limit_bytes=48 * 1024 * 1024,        # > default 16/32 MiB, < v7x 64 MiB
        ),
        cost_estimate=pl.CostEstimate(
            flops=int(flops), transcendentals=0, bytes_accessed=int(bytes_accessed)),
    )

    under_flat, over_flat, under_deg, over_deg = call(
        w, bias2, x_cat, s_scaled, base_masked)

    # single device reshape (no per-node Python loop); [k] indexes the torch list entry
    under_ibf = under_flat[:L].reshape(L, n_p1 * n, 2)
    over_ibf = over_flat[:L].reshape(L, n_p1 * n, 2)
    return under_ibf, over_ibf, under_deg[:L], over_deg[:L]


# --------------------- pure numpy reference (mirrors the torch code) ---------------------
def _reference(w, b, intervals, x_under, x_over):
    w = np.asarray(w, np.float32)
    b = np.asarray(b, np.float32)
    intervals = np.asarray(intervals, np.float32)
    x_under = np.asarray(x_under, np.float32)
    x_over = np.asarray(x_over, np.float32)
    L = w.shape[0]
    n = intervals.shape[0]
    w_pos = np.maximum(w, 0.0)
    w_neg = -np.maximum(-w, 0.0)

    def prod(inputs, weights):
        if np.all(np.abs(weights) == 0.0) or np.all(np.abs(inputs) == 0.0):
            return np.zeros(n + 1, np.float32), np.zeros(n, np.float32)
        return weights.reshape(1, -1) @ inputs, np.ones(n, np.float32)

    def gen_ibf(coeffs):
        coeffs = coeffs.reshape(-1)
        outs = []
        for i in range(n + 1):
            m = np.ones((n, 2), np.float32)
            if i != n:
                m[i, :] = intervals[i]
            m[0, :] *= coeffs[i]
            outs.append(m)
        return np.concatenate(outs, 0)

    ru, ro, du, do = [], [], [], []
    for k in range(L):
        c1, d1 = prod(x_over, w_neg[k]); c2, d2 = prod(x_under, w_pos[k])
        iu = np.array(c1 + c2); iu[-1] = iu[-1] + b[k]
        c1o, d1o = prod(x_over, w_pos[k]); c2o, d2o = prod(x_under, w_neg[k])
        io = np.array(c1o + c2o); io[-1] = io[-1] + b[k]
        ru.append(gen_ibf(iu)); ro.append(gen_ibf(io))
        du.append(np.maximum(d1, d2)); do.append(np.maximum(d1o, d2o))
    return ru, ro, np.stack(du), np.stack(do)


if __name__ == "__main__":
    n_vars = 5
    in_dim = 16
    layer_size = 20          # not a multiple of the tile -> exercises padding path

    key = jax.random.PRNGKey(0)
    k1, k2, k3, k4, k5 = jax.random.split(key, 5)

    layer_weights = jax.random.normal(k1, (layer_size, in_dim), jnp.float32)
    layer_weights = layer_weights.at[3].set(0.0)                        # all-zero node
    layer_weights = layer_weights.at[5].set(jnp.abs(layer_weights[5]))  # all-positive node
    layer_biases = jax.random.normal(k2, (layer_size,), jnp.float32)
    half = jnp.abs(jax.random.normal(k3, (n_vars,), jnp.float32)) + 0.5
    intervals = jnp.stack([-half, half], axis=1)                        # (n_vars, 2)
    x_under = jax.random.normal(k4, (in_dim, n_vars + 1), jnp.float32)
    x_over = x_under + jnp.abs(jax.random.normal(k5, (in_dim, n_vars + 1), jnp.float32))
    x_under_deg = jnp.ones((in_dim, n_vars), jnp.float32)   # unused on linear path
    x_over_deg = jnp.ones((in_dim, n_vars), jnp.float32)    # unused on linear path

    res_u, res_o, deg_u, deg_o = layer_module_forward(
        layer_weights, layer_biases, intervals, x_under, x_over,
        x_under_deg, x_over_deg, tile_l=8)                  # tile_l=8 -> 3 grid steps
    jax.block_until_ready((res_u, res_o, deg_u, deg_o))

    ref_u, ref_o, ref_du, ref_do = _reference(
        layer_weights, layer_biases, intervals, x_under, x_over)
    np.testing.assert_allclose(np.asarray(res_u), np.stack(ref_u), rtol=1e-4, atol=1e-5)
    np.testing.assert_allclose(np.asarray(res_o), np.stack(ref_o), rtol=1e-4, atol=1e-5)
    np.testing.assert_allclose(np.asarray(deg_u), ref_du, rtol=0, atol=0)
    np.testing.assert_allclose(np.asarray(deg_o), ref_do, rtol=0, atol=0)

    print("KERNEL_OK")
</pallas_src>

<mosaic_0001>
module attributes {stable_mosaic.version = 11 : i64} {
  func.func @_layer_kernel(%arg0: i32, %arg1: memref<8x16xf32, #tpu.memory_space<vmem>>, %arg2: memref<8x1xf32, #tpu.memory_space<vmem>>, %arg3: memref<32x6xf32, #tpu.memory_space<vmem>>, %arg4: memref<6x60xf32, #tpu.memory_space<vmem>>, %arg5: memref<1x60xf32, #tpu.memory_space<vmem>>, %arg6: memref<8x60xf32, #tpu.memory_space<vmem>>, %arg7: memref<8x60xf32, #tpu.memory_space<vmem>>, %arg8: memref<8x5xf32, #tpu.memory_space<vmem>>, %arg9: memref<8x5xf32, #tpu.memory_space<vmem>>) attributes {dimension_semantics = [#tpu.dimension_semantics<parallel>], iteration_bounds = array<i64: 3>, scalar_prefetch = 0 : i64, scratch_operands = 0 : i64, tpu.core_type = #tpu.core_type<tc>, window_params = [{transform_indices = @transform_0, window_bounds = array<i64: 8, 16>}, {transform_indices = @transform_1, window_bounds = array<i64: 8, 1>}, {pipeline_mode = #tpu.pipeline_mode<synchronous>, transform_indices = @transform_2, window_bounds = array<i64: 32, 6>}, {pipeline_mode = #tpu.pipeline_mode<synchronous>, transform_indices = @transform_3, window_bounds = array<i64: 6, 60>}, {pipeline_mode = #tpu.pipeline_mode<synchronous>, transform_indices = @transform_4, window_bounds = array<i64: 1, 60>}, {transform_indices = @transform_5, window_bounds = array<i64: 8, 60>}, {transform_indices = @transform_6, window_bounds = array<i64: 8, 60>}, {transform_indices = @transform_7, window_bounds = array<i64: 8, 5>}, {transform_indices = @transform_8, window_bounds = array<i64: 8, 5>}]} {
    %c0 = arith.constant 0 : index
    %c0_0 = arith.constant 0 : index
    %0 = vector.load %arg1[%c0, %c0_0] : memref<8x16xf32, #tpu.memory_space<vmem>>, vector<8x16xf32>
    %c0_1 = arith.constant 0 : index
    %c0_2 = arith.constant 0 : index
    %1 = vector.load %arg2[%c0_1, %c0_2] : memref<8x1xf32, #tpu.memory_space<vmem>>, vector<8x1xf32>
    %c0_3 = arith.constant 0 : index
    %c0_4 = arith.constant 0 : index
    %2 = vector.load %arg3[%c0_3, %c0_4] : memref<32x6xf32, #tpu.memory_space<vmem>>, vector<32x6xf32>
    %c0_5 = arith.constant 0 : index
    %c0_6 = arith.constant 0 : index
    %3 = vector.load %arg4[%c0_5, %c0_6] : memref<6x60xf32, #tpu.memory_space<vmem>>, vector<6x60xf32>
    %c0_7 = arith.constant 0 : index
    %c0_8 = arith.constant 0 : index
    %4 = vector.load %arg5[%c0_7, %c0_8] : memref<1x60xf32, #tpu.memory_space<vmem>>, vector<1x60xf32>
    %cst = arith.constant 0.000000e+00 : f32
    %5 = vector.broadcast %cst : f32 to vector<8x16xf32>
    %6 = arith.maximumf %0, %5 : vector<8x16xf32>
    %cst_9 = arith.constant 0.000000e+00 : f32
    %7 = vector.broadcast %cst_9 : f32 to vector<8x16xf32>
    %8 = arith.minimumf %0, %7 : vector<8x16xf32>
    %9 = vector.extract_strided_slice %2 {offsets = [0, 0], sizes = [16, 6], strides = [1, 1]} : vector<32x6xf32> to vector<16x6xf32>
    %10 = vector.extract_strided_slice %2 {offsets = [16, 0], sizes = [16, 6], strides = [1, 1]} : vector<32x6xf32> to vector<16x6xf32>
    %11 = math.absf %9 : vector<16x6xf32>
    %cst_10 = arith.constant dense<0xFF800000> : vector<16xf32>
    %12 = vector.multi_reduction <maximumf>, %11, %cst_10 [1] : vector<16x6xf32> to vector<16xf32>
    %13 = vector.shape_cast %12 : vector<16xf32> to vector<16x1xf32>
    %cst_11 = arith.constant dense<0xFF800000> : vector<1xf32>
    %14 = vector.multi_reduction <maximumf>, %13, %cst_11 [0] : vector<16x1xf32> to vector<1xf32>
    %15 = vector.shape_cast %14 : vector<1xf32> to vector<1x1xf32>
    %cst_12 = arith.constant 0.000000e+00 : f32
    %16 = vector.broadcast %cst_12 : f32 to vector<1x1xf32>
    %17 = arith.cmpf oeq, %15, %16 : vector<1x1xf32>
    %18 = math.absf %10 : vector<16x6xf32>
    %cst_13 = arith.constant dense<0xFF800000> : vector<16xf32>
    %19 = vector.multi_reduction <maximumf>, %18, %cst_13 [1] : vector<16x6xf32> to vector<16xf32>
    %20 = vector.shape_cast %19 : vector<16xf32> to vector<16x1xf32>
    %cst_14 = arith.constant dense<0xFF800000> : vector<1xf32>
    %21 = vector.multi_reduction <maximumf>, %20, %cst_14 [0] : vector<16x1xf32> to vector<1xf32>
    %22 = vector.shape_cast %21 : vector<1xf32> to vector<1x1xf32>
    %cst_15 = arith.constant 0.000000e+00 : f32
    %23 = vector.broadcast %cst_15 : f32 to vector<1x1xf32>
    %24 = arith.cmpf oeq, %22, %23 : vector<1x1xf32>
    %25 = math.absf %6 : vector<8x16xf32>
    %cst_16 = arith.constant dense<0xFF800000> : vector<8xf32>
    %26 = vector.multi_reduction <maximumf>, %25, %cst_16 [1] : vector<8x16xf32> to vector<8xf32>
    %27 = vector.shape_cast %26 : vector<8xf32> to vector<8x1xf32>
    %cst_17 = arith.constant 0.000000e+00 : f32
    %28 = vector.broadcast %cst_17 : f32 to vector<8x1xf32>
    %29 = arith.cmpf oeq, %27, %28 : vector<8x1xf32>
    %30 = math.absf %8 : vector<8x16xf32>
    %cst_18 = arith.constant dense<0xFF800000> : vector<8xf32>
    %31 = vector.multi_reduction <maximumf>, %30, %cst_18 [1] : vector<8x16xf32> to vector<8xf32>
    %32 = vector.shape_cast %31 : vector<8xf32> to vector<8x1xf32>
    %cst_19 = arith.constant 0.000000e+00 : f32
    %33 = vector.broadcast %cst_19 : f32 to vector<8x1xf32>
    %34 = arith.cmpf oeq, %32, %33 : vector<8x1xf32>
    %35 = vector.broadcast %17 : vector<1x1xi1> to vector<8x1xi1>
    %36 = arith.ori %34, %35 : vector<8x1xi1>
    %37 = vector.broadcast %24 : vector<1x1xi1> to vector<8x1xi1>
    %38 = arith.ori %29, %37 : vector<8x1xi1>
    %39 = vector.broadcast %17 : vector<1x1xi1> to vector<8x1xi1>
    %40 = arith.ori %29, %39 : vector<8x1xi1>
    %41 = vector.broadcast %24 : vector<1x1xi1> to vector<8x1xi1>
    %42 = arith.ori %34, %41 : vector<8x1xi1>
    %cst_20 = arith.constant dense<true> : vector<8x1xi1>
    %43 = arith.xori %36, %cst_20 : vector<8x1xi1>
    %cst_21 = arith.constant dense<true> : vector<8x1xi1>
    %44 = arith.xori %38, %cst_21 : vector<8x1xi1>
    %45 = arith.ori %43, %44 : vector<8x1xi1>
    %46 = arith.extui %45 : vector<8x1xi1> to vector<8x1xi32>
    %47 = arith.sitofp %46 : vector<8x1xi32> to vector<8x1xf32>
    %cst_22 = arith.constant dense<true> : vector<8x1xi1>
    %48 = arith.xori %40, %cst_22 : vector<8x1xi1>
    %cst_23 = arith.constant dense<true> : vector<8x1xi1>
    %49 = arith.xori %42, %cst_23 : vector<8x1xi1>
    %50 = arith.ori %48, %49 : vector<8x1xi1>
    %51 = arith.extui %50 : vector<8x1xi1> to vector<8x1xi32>
    %52 = arith.sitofp %51 : vector<8x1xi32> to vector<8x1xf32>
    %53 = vector.shape_cast %47 : vector<8x1xf32> to vector<8x1xf32>
    %54 = vector.broadcast %53 : vector<8x1xf32> to vector<8x5xf32>
    %c0_24 = arith.constant 0 : index
    %c0_25 = arith.constant 0 : index
    %55 = vector.load %arg8[%c0_24, %c0_25] : memref<8x5xf32, #tpu.memory_space<vmem>>, vector<8x5xf32>
    tpu.vector_store %arg8[%c0_24, %c0_25], %54 {strides = array<i32>} : memref<8x5xf32, #tpu.memory_space<vmem>>, vector<8x5xf32>,
    %56 = vector.shape_cast %52 : vector<8x1xf32> to vector<8x1xf32>
    %57 = vector.broadcast %56 : vector<8x1xf32> to vector<8x5xf32>
    %c0_26 = arith.constant 0 : index
    %c0_27 = arith.constant 0 : index
    %58 = vector.load %arg9[%c0_26, %c0_27] : memref<8x5xf32, #tpu.memory_space<vmem>>, vector<8x5xf32>
    tpu.vector_store %arg9[%c0_26, %c0_27], %57 {strides = array<i32>} : memref<8x5xf32, #tpu.memory_space<vmem>>, vector<8x5xf32>,
    %59 = tpu.concatenate %8, %6 in 1 : vector<8x16xf32>, vector<8x16xf32> -> vector<8x32xf32>
    %60 = tpu.concatenate %6, %8 in 1 : vector<8x16xf32>, vector<8x16xf32> -> vector<8x32xf32>
    %61 = tpu.concatenate %59, %60 in 0 : vector<8x32xf32>, vector<8x32xf32> -> vector<16x32xf32>
    %cst_28 = arith.constant dense<0.000000e+00> : vector<16x6xf32>
    %62 = tpu.matmul %61, %2, %cst_28 {dimension_numbers = #tpu.dot_dimension_numbers<[1], [0], [0], [1], [0, 0, 1, 1], [], []>} : vector<16x32xf32>, vector<32x6xf32>, vector<16x6xf32> -> vector<16x6xf32>
    %63 = tpu.iota {dimensions = array<i32: 1>} : vector<8x6xi32>
    %c5_i32 = arith.constant 5 : i32
    %64 = vector.broadcast %c5_i32 : i32 to vector<8x6xi32>
    %65 = arith.cmpi eq, %63, %64 : vector<8x6xi32>
    %66 = arith.andi %36, %38 : vector<8x1xi1>
    %67 = arith.andi %40, %42 : vector<8x1xi1>
    %cst_29 = arith.constant dense<true> : vector<8x1xi1>
    %68 = arith.xori %66, %cst_29 : vector<8x1xi1>
    %69 = vector.broadcast %68 : vector<8x1xi1> to vector<8x6xi1>
    %70 = arith.ori %69, %65 : vector<8x6xi1>
    %cst_30 = arith.constant 0.000000e+00 : f32
    %71 = vector.shape_cast %1 : vector<8x1xf32> to vector<8x1xf32>
    %72 = vector.broadcast %71 : vector<8x1xf32> to vector<8x6xf32>
    %73 = vector.broadcast %cst_30 : f32 to vector<8x6xf32>
    %74 = arith.select %70, %72, %73 : vector<8x6xi1>, vector<8x6xf32>
    %cst_31 = arith.constant dense<true> : vector<8x1xi1>
    %75 = arith.xori %67, %cst_31 : vector<8x1xi1>
    %76 = vector.broadcast %75 : vector<8x1xi1> to vector<8x6xi1>
    %77 = arith.ori %76, %65 : vector<8x6xi1>
    %cst_32 = arith.constant 0.000000e+00 : f32
    %78 = vector.shape_cast %1 : vector<8x1xf32> to vector<8x1xf32>
    %79 = vector.broadcast %78 : vector<8x1xf32> to vector<8x6xf32>
    %80 = vector.broadcast %cst_32 : f32 to vector<8x6xf32>
    %81 = arith.select %77, %79, %80 : vector<8x6xi1>, vector<8x6xf32>
    %82 = tpu.concatenate %74, %81 in 0 : vector<8x6xf32>, vector<8x6xf32> -> vector<16x6xf32>
    %83 = arith.addf %62, %82 : vector<16x6xf32>
    %cst_33 = arith.constant dense<0.000000e+00> : vector<16x60xf32>
    %84 = tpu.matmul %83, %3, %cst_33 {dimension_numbers = #tpu.dot_dimension_numbers<[1], [0], [0], [1], [0, 0, 1, 1], [], []>} : vector<16x6xf32>, vector<6x60xf32>, vector<16x60xf32> -> vector<16x60xf32>
    %85 = vector.broadcast %4 : vector<1x60xf32> to vector<16x60xf32>
    %86 = arith.addf %84, %85 : vector<16x60xf32>
    %87 = vector.extract_strided_slice %86 {offsets = [0, 0], sizes = [8, 60], strides = [1, 1]} : vector<16x60xf32> to vector<8x60xf32>
    %c0_34 = arith.constant 0 : index
    %c0_35 = arith.constant 0 : index
    %88 = vector.load %arg6[%c0_34, %c0_35] : memref<8x60xf32, #tpu.memory_space<vmem>>, vector<8x60xf32>
    tpu.vector_store %arg6[%c0_34, %c0_35], %87 {strides = array<i32>} : memref<8x60xf32, #tpu.memory_space<vmem>>, vector<8x60xf32>,
    %89 = vector.extract_strided_slice %86 {offsets = [8, 0], sizes = [8, 60], strides = [1, 1]} : vector<16x60xf32> to vector<8x60xf32>
    %c0_36 = arith.constant 0 : index
    %c0_37 = arith.constant 0 : index
    %90 = vector.load %arg7[%c0_36, %c0_37] : memref<8x60xf32, #tpu.memory_space<vmem>>, vector<8x60xf32>
    tpu.vector_store %arg7[%c0_36, %c0_37], %89 {strides = array<i32>} : memref<8x60xf32, #tpu.memory_space<vmem>>, vector<8x60xf32>,
    return
  }
  func.func @transform_0(%arg0: i32) -> (i32, i32) {
    %c0_i32 = arith.constant 0 : i32
    %c0_i32_0 = arith.constant 0 : i32
    return %arg0, %c0_i32 : i32, i32
  }
  func.func @transform_1(%arg0: i32) -> (i32, i32) {
    %c0_i32 = arith.constant 0 : i32
    %c0_i32_0 = arith.constant 0 : i32
    return %arg0, %c0_i32 : i32, i32
  }
  func.func @transform_2(%arg0: i32) -> (i32, i32) {
    %c0_i32 = arith.constant 0 : i32
    %c0_i32_0 = arith.constant 0 : i32
    %c0_i32_1 = arith.constant 0 : i32
    return %c0_i32, %c0_i32_0 : i32, i32
  }
  func.func @transform_3(%arg0: i32) -> (i32, i32) {
    %c0_i32 = arith.constant 0 : i32
    %c0_i32_0 = arith.constant 0 : i32
    %c0_i32_1 = arith.constant 0 : i32
    return %c0_i32, %c0_i32_0 : i32, i32
  }
  func.func @transform_4(%arg0: i32) -> (i32, i32) {
    %c0_i32 = arith.constant 0 : i32
    %c0_i32_0 = arith.constant 0 : i32
    %c0_i32_1 = arith.constant 0 : i32
    return %c0_i32, %c0_i32_0 : i32, i32
  }
  func.func @transform_5(%arg0: i32) -> (i32, i32) {
    %c0_i32 = arith.constant 0 : i32
    %c0_i32_0 = arith.constant 0 : i32
    return %arg0, %c0_i32 : i32, i32
  }
  func.func @transform_6(%arg0: i32) -> (i32, i32) {
    %c0_i32 = arith.constant 0 : i32
    %c0_i32_0 = arith.constant 0 : i32
    return %arg0, %c0_i32 : i32, i32
  }
  func.func @transform_7(%arg0: i32) -> (i32, i32) {
    %c0_i32 = arith.constant 0 : i32
    %c0_i32_0 = arith.constant 0 : i32
    return %arg0, %c0_i32 : i32, i32
  }
  func.func @transform_8(%arg0: i32) -> (i32, i32) {
    %c0_i32 = arith.constant 0 : i32
    %c0_i32_0 = arith.constant 0 : i32
    return %arg0, %c0_i32 : i32, i32
  }
}

</mosaic_0001>

<llo_original>
// kernel: tpu_custom_call.1
$region0: #{tpu_custom_call.1}
  #allocation0 [shape = 'u32[]', space=smem, size = 0x4, offset = 0x4, fixed_abs, tag = 'smem constant byte address 0x4 - core index']
  #allocation1 [shape = 'u32[144,128]{1,0:T(1,128)}', space=vmem, size = 0x12000, scoped, tag = 'internal scratch']
  %s0 = inlined_call_operand.vmem [shape: f32[24,16], index: 0, kind: input, shape index: {}]
  %s1 = inlined_call_operand.vmem [shape: f32[24,1], index: 1, kind: input, shape index: {}]
  %s2 = inlined_call_operand.vmem [shape: f32[32,6], index: 2, kind: input, shape index: {}]
  %s3 = inlined_call_operand.vmem [shape: f32[6,60], index: 3, kind: input, shape index: {}]
  %s4 = inlined_call_operand.vmem [shape: f32[1,60], index: 4, kind: input, shape index: {}]
  %s5 = inlined_call_operand.hbm [shape: f32[24,60], index: 5, kind: output, shape index: {0}]
  %s6 = inlined_call_operand.hbm [shape: f32[24,60], index: 6, kind: output, shape index: {1}]
  %s7 = inlined_call_operand.vmem [shape: f32[24,5], index: 7, kind: output, shape index: {2}]
  %s8 = inlined_call_operand.vmem [shape: f32[24,5], index: 8, kind: output, shape index: {3}]
  %9 = xla_tuple %s5, %s6, %s7, %s8
  %s10 = sld [smem:[#allocation0]]
  $region77: #{tpu_custom_call.1} parent=0
    _
  %s12 = ssub.s32 1, %s10
  %s13 = scalar_select 0, %s12, %s10
  $region1: #{tpu_custom_call.1} parent=0
    #allocation2 [shape = 'u8[8192]{0}', space=vmem, size = 0x2000, scoped, tag = 'output window, operand 0']
    #allocation3 [shape = 's32[2]{0}', space=sflag, size = 0x8, scoped, tag = 'scoped memory for tpu_custom_call.1']
    #allocation4 [shape = 'u8[8192]{0}', space=vmem, size = 0x2000, scoped, tag = 'output window, operand 1']
    #allocation5 [shape = 's32[2]{0}', space=sflag, size = 0x8, scoped, tag = 'scoped memory for tpu_custom_call.1']
    %14 = vsyncpa [#allocation3], 0
    %s15 = scalar_lea.sflag [#allocation3], 1
    %16 = vsyncpa %s15, 0
    %17 = vsyncpa [#allocation5], 0
    %s18 = scalar_lea.sflag [#allocation5], 1
    %19 = vsyncpa %s18, 0
    loop: start=0, step=1, limit=5
    $region2: #{tpu_custom_call.1} parent=1 // loop_pre_header
      _
    $region3: #{tpu_custom_call.1} parent=1 // loop_header
      %s21 = sphi 0, %s25
      %p22 = scmp.ge.s32.totalorder %s21, 5
      %s31 = sphi 0, %s33
      %s34 = sphi 0, %s31
      %s35 = sphi 0, %s34
      %s51 = sphi 0, %s35
      %s57 = sphi 0, %s59
      %s60 = sphi 0, %s57
      %s61 = sphi 0, %s60
      %s77 = sphi 0, %s61
      %s81 = sphi 0, %s81
      %s83 = sphi 0, %s81
      %s84 = sphi 0, %s83
      %s98 = sphi 0, %s84
      %s102 = sphi 0, %s102
      %s104 = sphi 0, %s102
      %s105 = sphi 0, %s104
      %s119 = sphi 0, %s105
      %s123 = sphi 0, %s123
      %s125 = sphi 0, %s123
      %s126 = sphi 0, %s125
      %s140 = sphi 0, %s126
      %s146 = sphi 0, %s148
      %s149 = sphi 0, %s146
      %s150 = sphi 0, %s149
      %s166 = sphi 0, %s150
      %s172 = sphi 0, %s174
      %s175 = sphi 0, %s172
      %s176 = sphi 0, %s175
      %s192 = sphi 0, %s176
      %s198 = sphi 0, %s200
      %s201 = sphi 0, %s198
      %s202 = sphi 0, %s201
      %s218 = sphi 0, %s202
      %s224 = sphi 0, %s226
      %s227 = sphi 0, %s224
      %s228 = sphi 0, %s227
      %s244 = sphi 0, %s228
    $region4: #{tpu_custom_call.1} parent=1 // loop_header_branch
      %24 = sbr.rel (%p22) target = $region8
    $region5: #{tpu_custom_call.1} parent=1 // loop_body
      %s26 = ssub.s32 %s21, 1
      %s27 = ssub.s32 %s21, 2
      %s28 = sadd.s32 %s21, 1
      %s29 = ssub.s32 %s21, %s28
      %p30 = scmp.eq.s32.totalorder %s29, 0
      %s32 = sadd.s32 %s31, 1
      %s33 = scalar_select %p30, %s31, %s32
      %p36 = pneg %p30
      %p37 = scmp.eq.s32.totalorder %s21, 2
      %p38 = por %p36, %p37
      %p39 = scmp.ne.s32.totalorder %s31, %s34
      %p40 = scmp.eq.s32.totalorder %s21, 0
      %p41 = por %p39, %p40
      %p42 = scmp.ne.s32.totalorder %s31, %s34
      %p43 = scmp.eq.s32.totalorder %s26, 2
      %p44 = por %p42, %p43
      %p45 = scmp.ne.s32.totalorder %s34, %s35
      %p46 = scmp.eq.s32.totalorder %s26, 0
      %p47 = por %p45, %p46
      %p48 = scmp.ne.s32.totalorder %s34, %s35
      %p49 = scmp.eq.s32.totalorder %s27, 2
      %p50 = por %p48, %p49
      %p52 = scmp.ne.s32.totalorder %s35, %s51
      %p53 = scmp.eq.s32.totalorder %s27, 0
      %p54 = por %p52, %p53
      %s55 = ssub.s32 %s21, %s28
      %p56 = scmp.eq.s32.totalorder %s55, 0
      %s58 = sadd.s32 %s57, 1
      %s59 = scalar_select %p56, %s57, %s58
      %p62 = pneg %p56
      %p63 = scmp.eq.s32.totalorder %s21, 2
      %p64 = por %p62, %p63
      %p65 = scmp.ne.s32.totalorder %s57, %s60
      %p66 = scmp.eq.s32.totalorder %s21, 0
      %p67 = por %p65, %p66
      %p68 = scmp.ne.s32.totalorder %s57, %s60
      %p69 = scmp.eq.s32.totalorder %s26, 2
      %p70 = por %p68, %p69
      %p71 = scmp.ne.s32.totalorder %s60, %s61
      %p72 = scmp.eq.s32.totalorder %s26, 0
      %p73 = por %p71, %p72
      %p74 = scmp.ne.s32.totalorder %s60, %s61
      %p75 = scmp.eq.s32.totalorder %s27, 2
      %p76 = por %p74, %p75
      %p78 = scmp.ne.s32.totalorder %s61, %s77
      %p79 = scmp.eq.s32.totalorder %s27, 0
      %p80 = por %p78, %p79
      %s82 = sadd.s32 %s81, 1
      %p85 = scmp.eq.s32.totalorder %s21, 2
      %p86 = scmp.ne.s32.totalorder %s81, %s83
      %p87 = scmp.eq.s32.totalorder %s21, 0
      %p88 = por %p86, %p87
      %p89 = scmp.ne.s32.totalorder %s81, %s83
      %p90 = scmp.eq.s32.totalorder %s26, 2
      %p91 = por %p89, %p90
      %p92 = scmp.ne.s32.totalorder %s83, %s84
      %p93 = scmp.eq.s32.totalorder %s26, 0
      %p94 = por %p92, %p93
      %p95 = scmp.ne.s32.totalorder %s83, %s84
      %p96 = scmp.eq.s32.totalorder %s27, 2
      %p97 = por %p95, %p96
      %p99 = scmp.ne.s32.totalorder %s84, %s98
      %p100 = scmp.eq.s32.totalorder %s27, 0
      %p101 = por %p99, %p100
      %s103 = sadd.s32 %s102, 1
      %p106 = scmp.eq.s32.totalorder %s21, 2
      %p107 = scmp.ne.s32.totalorder %s102, %s104
      %p108 = scmp.eq.s32.totalorder %s21, 0
      %p109 = por %p107, %p108
      %p110 = scmp.ne.s32.totalorder %s102, %s104
      %p111 = scmp.eq.s32.totalorder %s26, 2
      %p112 = por %p110, %p111
      %p113 = scmp.ne.s32.totalorder %s104, %s105
      %p114 = scmp.eq.s32.totalorder %s26, 0
      %p115 = por %p113, %p114
      %p116 = scmp.ne.s32.totalorder %s104, %s105
      %p117 = scmp.eq.s32.totalorder %s27, 2
      %p118 = por %p116, %p117
      %p120 = scmp.ne.s32.totalorder %s105, %s119
      %p121 = scmp.eq.s32.totalorder %s27, 0
      %p122 = por %p120, %p121
      %s124 = sadd.s32 %s123, 1
      %p127 = scmp.eq.s32.totalorder %s21, 2
      %p128 = scmp.ne.s32.totalorder %s123, %s125
      %p129 = scmp.eq.s32.totalorder %s21, 0
      %p130 = por %p128, %p129
      %p131 = scmp.ne.s32.totalorder %s123, %s125
      %p132 = scmp.eq.s32.totalorder %s26, 2
      %p133 = por %p131, %p132
      %p134 = scmp.ne.s32.totalorder %s125, %s126
      %p135 = scmp.eq.s32.totalorder %s26, 0
      %p136 = por %p134, %p135
      %p137 = scmp.ne.s32.totalorder %s125, %s126
      %p138 = scmp.eq.s32.totalorder %s27, 2
      %p139 = por %p137, %p138
      %p141 = scmp.ne.s32.totalorder %s126, %s140
      %p142 = scmp.eq.s32.totalorder %s27, 0
      %p143 = por %p141, %p142
      %s144 = ssub.s32 %s21, %s28
      %p145 = scmp.eq.s32.totalorder %s144, 0
      %s147 = sadd.s32 %s146, 1
      %s148 = scalar_select %p145, %s146, %s147
      %p151 = pneg %p145
      %p152 = scmp.eq.s32.totalorder %s21, 2
      %p153 = por %p151, %p152
      %p154 = scmp.ne.s32.totalorder %s146, %s149
      %p155 = scmp.eq.s32.totalorder %s21, 0
      %p156 = por %p154, %p155
      %p157 = scmp.ne.s32.totalorder %s146, %s149
      %p158 = scmp.eq.s32.totalorder %s26, 2
      %p159 = por %p157, %p158
      %p160 = scmp.ne.s32.totalorder %s149, %s150
      %p161 = scmp.eq.s32.totalorder %s26, 0
      %p162 = por %p160, %p161
      %p163 = scmp.ne.s32.totalorder %s149, %s150
      %p164 = scmp.eq.s32.totalorder %s27, 2
      %p165 = por %p163, %p164
      %p167 = scmp.ne.s32.totalorder %s150, %s166
      %p168 = scmp.eq.s32.totalorder %s27, 0
      %p169 = por %p167, %p168
      %s170 = ssub.s32 %s21, %s28
      %p171 = scmp.eq.s32.totalorder %s170, 0
      %s173 = sadd.s32 %s172, 1
      %s174 = scalar_select %p171, %s172, %s173
      %p177 = pneg %p171
      %p178 = scmp.eq.s32.totalorder %s21, 2
      %p179 = por %p177, %p178
      %p180 = scmp.ne.s32.totalorder %s172, %s175
      %p181 = scmp.eq.s32.totalorder %s21, 0
      %p182 = por %p180, %p181
      %p183 = scmp.ne.s32.totalorder %s172, %s175
      %p184 = scmp.eq.s32.totalorder %s26, 2
      %p185 = por %p183, %p184
      %p186 = scmp.ne.s32.totalorder %s175, %s176
      %p187 = scmp.eq.s32.totalorder %s26, 0
      %p188 = por %p186, %p187
      %p189 = scmp.ne.s32.totalorder %s175, %s176
      %p190 = scmp.eq.s32.totalorder %s27, 2
      %p191 = por %p189, %p190
      %p193 = scmp.ne.s32.totalorder %s176, %s192
      %p194 = scmp.eq.s32.totalorder %s27, 0
      %p195 = por %p193, %p194
      %s196 = ssub.s32 %s21, %s28
      %p197 = scmp.eq.s32.totalorder %s196, 0
      %s199 = sadd.s32 %s198, 1
      %s200 = scalar_select %p197, %s198, %s199
      %p203 = pneg %p197
      %p204 = scmp.eq.s32.totalorder %s21, 2
      %p205 = por %p203, %p204
      %p206 = scmp.ne.s32.totalorder %s198, %s201
      %p207 = scmp.eq.s32.totalorder %s21, 0
      %p208 = por %p206, %p207
      %p209 = scmp.ne.s32.totalorder %s198, %s201
      %p210 = scmp.eq.s32.totalorder %s26, 2
      %p211 = por %p209, %p210
      %p212 = scmp.ne.s32.totalorder %s201, %s202
      %p213 = scmp.eq.s32.totalorder %s26, 0
      %p214 = por %p212, %p213
      %p215 = scmp.ne.s32.totalorder %s201, %s202
      %p216 = scmp.eq.s32.totalorder %s27, 2
      %p217 = por %p215, %p216
      %p219 = scmp.ne.s32.totalorder %s202, %s218
      %p220 = scmp.eq.s32.totalorder %s27, 0
      %p221 = por %p219, %p220
      %s222 = ssub.s32 %s21, %s28
      %p223 = scmp.eq.s32.totalorder %s222, 0
      %s225 = sadd.s32 %s224, 1
      %s226 = scalar_select %p223, %s224, %s225
      %p229 = pneg %p223
      %p230 = scmp.eq.s32.totalorder %s21, 2
      %p231 = por %p229, %p230
      %p232 = scmp.ne.s32.totalorder %s224, %s227
      %p233 = scmp.eq.s32.totalorder %s21, 0
      %p234 = por %p232, %p233
      %p235 = scmp.ne.s32.totalorder %s224, %s227
      %p236 = scmp.eq.s32.totalorder %s26, 2
      %p237 = por %p235, %p236
      %p238 = scmp.ne.s32.totalorder %s227, %s228
      %p239 = scmp.eq.s32.totalorder %s26, 0
      %p240 = por %p238, %p239
      %p241 = scmp.ne.s32.totalorder %s227, %s228
      %p242 = scmp.eq.s32.totalorder %s27, 2
      %p243 = por %p241, %p242
      %p245 = scmp.ne.s32.totalorder %s228, %s244
      %p246 = scmp.eq.s32.totalorder %s27, 0
      %p247 = por %p245, %p246
      %p248 = scmp.le.s32.totalorder 1, %s21
      %p249 = scmp.lt.s32.totalorder %s21, 4
      %p250 = pnand %p248, %p249
      %p251 = pneg %p250
      // Predicated region
      $region9: #{tpu_custom_call.1} parent=5 // pred_check
        _
      $region10: #{tpu_custom_call.1} parent=5 // pred_check_branch
        %253 = sbr.rel (%p250) target = $region12
      $region11: #{tpu_custom_call.1} parent=5 // pred_region
        %s254 = ssub.s32 %s21, 1
        // Predicated region
        $region13: #{tpu_custom_call.1} parent=11 // pred_check
          %p255 = pneg %p94
        $region14: #{tpu_custom_call.1} parent=11 // pred_check_branch
          %257 = sbr.rel (%p255) target = $region16
        $region15: #{tpu_custom_call.1} parent=11 // pred_region
          _
        $region16: #{tpu_custom_call.1} parent=11 // pred_fallthru
          _
        // Predicated region
        $region17: #{tpu_custom_call.1} parent=11 // pred_check
          %p258 = pneg %p115
        $region18: #{tpu_custom_call.1} parent=11 // pred_check_branch
          %260 = sbr.rel (%p258) target = $region20
        $region19: #{tpu_custom_call.1} parent=11 // pred_region
          _
        $region20: #{tpu_custom_call.1} parent=11 // pred_fallthru
          _
        // Predicated region
        $region21: #{tpu_custom_call.1} parent=11 // pred_check
          %p261 = pneg %p136
        $region22: #{tpu_custom_call.1} parent=11 // pred_check_branch
          %263 = sbr.rel (%p261) target = $region24
        $region23: #{tpu_custom_call.1} parent=11 // pred_region
          _
        $region24: #{tpu_custom_call.1} parent=11 // pred_fallthru
          _
      $region12: #{tpu_custom_call.1} parent=5 // pred_fallthru
        _
      %p264 = scmp.lt.s32.totalorder %s21, 3
      // Predicated region
      $region25: #{tpu_custom_call.1} parent=5 // pred_check
        %p265 = pneg %p264
      $region26: #{tpu_custom_call.1} parent=5 // pred_check_branch
        %267 = sbr.rel (%p265) target = $region28
      $region27: #{tpu_custom_call.1} parent=5 // pred_region
        // Predicated region
        $region29: #{tpu_custom_call.1} parent=27 // pred_check
          %p268 = pneg %p41
        $region30: #{tpu_custom_call.1} parent=27 // pred_check_branch
          %270 = sbr.rel (%p268) target = $region32
        $region31: #{tpu_custom_call.1} parent=27 // pred_region
          %p271 = scmp.lt.s32.totalorder %s21, 2
          %s272 = scalar_select %p271, %s21, 2
          %s273 = smul.addr %s272, 8
          %s274 = scalar_lea.vmem %s0, %s273
        $region32: #{tpu_custom_call.1} parent=27 // pred_fallthru
          _
        // Predicated region
        $region33: #{tpu_custom_call.1} parent=27 // pred_check
          %p275 = pneg %p67
        $region34: #{tpu_custom_call.1} parent=27 // pred_check_branch
          %277 = sbr.rel (%p275) target = $region36
        $region35: #{tpu_custom_call.1} parent=27 // pred_region
          %p278 = scmp.lt.s32.totalorder %s21, 2
          %s279 = scalar_select %p278, %s21, 2
          %s280 = smul.addr %s279, 8
          %s281 = scalar_lea.vmem %s1, %s280
        $region36: #{tpu_custom_call.1} parent=27 // pred_fallthru
          _
      $region28: #{tpu_custom_call.1} parent=5 // pred_fallthru
        _
      %p282 = scmp.le.s32.totalorder 1, %s21
      %p283 = scmp.lt.s32.totalorder %s21, 4
      %p284 = pnand %p282, %p283
      %p285 = pneg %p284
      // Predicated region
      $region37: #{tpu_custom_call.1} parent=5 // pred_check
        _
      $region38: #{tpu_custom_call.1} parent=5 // pred_check_branch
        %287 = sbr.rel (%p284) target = $region40
      $region39: #{tpu_custom_call.1} parent=5 // pred_region
        %s288 = ssub.s32 %s21, 1
        %p289 = scmp.lt.s32.totalorder %s26, 2
        %s290 = scalar_select %p289, %s26, 2
        %s291 = smul.addr %s290, 8
        %s292 = scalar_lea.vmem %s0, %s291
        %p293 = pneg %p47
        %p294 = pneg %p44
        %p295 = scmp.lt.s32.totalorder %s26, 2
        %s296 = scalar_select %p295, %s26, 2
        %s297 = smul.addr %s296, 8
        %s298 = scalar_lea.vmem %s1, %s297
        %p299 = pneg %p73
        %p300 = pneg %p70
        %p301 = pneg %p94
        %p302 = pneg %p91
        %p303 = pneg %p115
        %p304 = pneg %p112
        %p305 = pneg %p136
        %p306 = pneg %p133
        %p307 = pneg %p162
        %p308 = pneg %p159
        %s309 = sand.u32 %s149, 1
        %s310 = scalar_lea.sflag [#allocation3], %s309
        %s311 = sand.u32 %s149, 1
        %s312 = smul.addr %s311, 8
        %s313 = scalar_lea.vmem [#allocation2], %s312
        %p314 = pneg %p188
        %p315 = pneg %p185
        %s316 = sand.u32 %s175, 1
        %s317 = scalar_lea.sflag [#allocation5], %s316
        %s318 = sand.u32 %s175, 1
        %s319 = smul.addr %s318, 8
        %s320 = scalar_lea.vmem [#allocation4], %s319
        %p321 = pneg %p214
        %p322 = pneg %p211
        %p323 = scmp.lt.s32.totalorder %s26, 2
        %s324 = scalar_select %p323, %s26, 2
        %s325 = smul.addr %s324, 8
        %s326 = scalar_lea.vmem %s7, %s325
        %p327 = pneg %p240
        %p328 = pneg %p237
        %p329 = scmp.lt.s32.totalorder %s26, 2
        %s330 = scalar_select %p329, %s26, 2
        %s331 = smul.addr %s330, 8
        %s332 = scalar_lea.vmem %s8, %s331
        %p333 = scmp.lt.s32.totalorder %s26, 2
        %s334 = scalar_select %p333, %s26, 2
        %s335 = smul.addr %s334, 8
        %s336 = scalar_lea.vmem %s0, %s335
        %p337 = scmp.lt.s32.totalorder %s26, 2
        %s338 = scalar_select %p337, %s26, 2
        %s339 = smul.addr %s338, 8
        %s340 = scalar_lea.vmem %s1, %s339
        %p341 = scmp.lt.s32.totalorder %s26, 2
        %s342 = scalar_select %p341, %s26, 2
        %s343 = smul.addr %s342, 8
        %s344 = scalar_lea.vmem %s7, %s343
        %p345 = scmp.lt.s32.totalorder %s26, 2
        %s346 = scalar_select %p345, %s26, 2
        %s347 = smul.addr %s346, 8
        %s348 = scalar_lea.vmem %s8, %s347
        %v349 = vld [vmem:[%s336] sm:$0xff]
        %v350 = vld [vmem:[%s340] sm:$0xff]
        %v351 = vld [vmem:[%s2] sm:$0xff]
        %v352 = vld [vmem:[%s2 + $0x8] sm:$0xff]
        %v353 = vld [vmem:[%s2 + $0x10] sm:$0xff]
        %v354 = vld [vmem:[%s2 + $0x18] sm:$0xff]
        %v355 = vld [vmem:[%s3] sm:$0x3f]
        %v356 = vld [vmem:[%s4] sm:$0x1]
        %v357 = vmax.f32 %v349, 0.0
        %v358 = vmin.f32 %v349, 0.0
        %v359 = vand.u32 2147483647, %v351
        %v360 = vand.u32 2147483647, %v352
        %vm361 = vcmask 48128
        %v362 = vsel %vm361, %v359, -inf
        %363 = vmax.xlane.f32.xlu0 %v362
        %v364 = vpop.xlane.xlu0 %363
        %v365 = vsel %vm361, %v360, -inf
        %366 = vmax.xlane.f32.xlu0 %v365
        %v367 = vpop.xlane.xlu0 %366
        %v368 = vmax.f32 %v364, %v367
        %v369 = vrot.slane %v368, 4
        %v370 = vmax.f32 %v368, %v369
        %v371 = vrot.slane %v370, 2
        %v372 = vmax.f32 %v370, %v371
        %v373 = vrot.slane %v372, 1
        %v374 = vmax.f32 %v372, %v373
        %vm375 = vcmp.eq.f32.partialorder %v374, 0.0
        %v376 = vand.u32 2147483647, %v353
        %v377 = vand.u32 2147483647, %v354
        %v378 = vsel %vm361, %v376, -inf
        %379 = vmax.xlane.f32.xlu0 %v378
        %v380 = vpop.xlane.xlu0 %379
        %v381 = vsel %vm361, %v377, -inf
        %382 = vmax.xlane.f32.xlu0 %v381
        %v383 = vpop.xlane.xlu0 %382
        %v384 = vmax.f32 %v380, %v383
        %v385 = vrot.slane %v384, 4
        %v386 = vmax.f32 %v384, %v385
        %v387 = vrot.slane %v386, 2
        %v388 = vmax.f32 %v386, %v387
        %v389 = vrot.slane %v388, 1
        %v390 = vmax.f32 %v388, %v389
        %vm391 = vcmp.eq.f32.partialorder %v390, 0.0
        %v392 = vand.u32 2147483647, %v357
        %vm393 = vcmask 130048
        %v394 = vsel %vm393, %v392, -inf
        %395 = vmax.xlane.f32.xlu0 %v394
        %v396 = vpop.xlane.xlu0 %395
        %vm397 = vcmp.eq.f32.partialorder %v396, 0.0
        %v398 = vand.u32 2147483647, %v358
        %v399 = vsel %vm393, %v398, -inf
        %400 = vmax.xlane.f32.xlu0 %v399
        %v401 = vpop.xlane.xlu0 %400
        %vm402 = vcmp.eq.f32.partialorder %v401, 0.0
        %v403 = vsel %vm375, 1, 0
        %vm404 = vcmp.eq.s32.totalorder %v403, 1
        %vm405 = vmor %vm402, %vm404
        %v406 = vsel %vm391, 1, 0
        %vm407 = vcmp.eq.s32.totalorder %v406, 1
        %vm408 = vmor %vm397, %vm407
        %vm409 = vmor %vm397, %vm404
        %vm410 = vmor %vm402, %vm407
        %vm411 = vmxor %vm405, 1
        %vm412 = vmxor %vm408, 1
        %vm413 = vmor %vm411, %vm412
        %v414 = vsel %vm413, 1, 0
        %v415 = vcvt.s32.f32 %v414
        %vm416 = vmxor %vm409, 1
        %vm417 = vmxor %vm410, 1
        %vm418 = vmor %vm416, %vm417
        %v419 = vsel %vm418, 1, 0
        %v420 = vcvt.s32.f32 %v419
        %vm421 = vcmask 39936
        %422 = vst.msk [vmem:[%s344] sm:$0xff] %vm421, %v415
        %423 = vst.msk [vmem:[%s348] sm:$0xff] %vm421, %v420
        %425 = vrot.lane.b32.xlu0 %v357, 16
        %v426 = vpop.permute.xlu0 %425
        %v428 = vsel %vm393, %v358, %v426
        %430 = vrot.lane.b32.xlu0 %v358, 16
        %v431 = vpop.permute.xlu0 %430
        %v433 = vsel %vm393, %v357, %v431
        %v434 = vlaneseq
        %v435 = vand.u32 %v434, 127
        %vm436 = vcmp.eq.s32.totalorder %v435, 5
        %vm437 = vmand %vm405, %vm408
        %vm438 = vmand %vm409, %vm410
        %vm439 = vmxor %vm437, 1
        %v440 = vsel %vm439, 1, 0
        %vm441 = vcmp.eq.s32.totalorder %v440, 1
        %vm442 = vmor %vm441, %vm436
        %444 = vset.pattern.permute.xlu0 0
        %445 = vperm.xlu0 %444, %v350
        %v446 = vpop.permute.xlu0 %445
        %v448 = vsel %vm442, %v446, 0.0
        %vm449 = vmxor %vm438, 1
        %v450 = vsel %vm449, 1, 0
        %vm451 = vcmp.eq.s32.totalorder %v450, 1
        %vm452 = vmor %vm451, %vm436
        %v453 = vsel %vm452, %v446, 0.0
        %vm454 = vcmask 261120
        %v456 = vsel %vm454, %v428, 0
        %v459 = vsel %vm454, %v433, 0
        %461 = vmatprep.subr.mxu0 0.0
        %462 = vmatpush1.msra.mxu0 %v351
        %463 = vmatprep.subr.mxu0 0.0
        %464 = vmatpush1.msra.mxu0 %v352
        %465 = vmatprep.subr.mxu0 0.0
        %466 = vmatpush1.msra.mxu0 %v353
        %467 = vmatprep.subr.mxu0 0.0
        %468 = vmatpush1.msra.mxu0 %v354
        %469 = vmatprep.subr.mxu0 0.0
        %470 = vmatpush1.msra.mxu0 0.0
        %471 = vmatprep.subr.mxu0 0.0
        %472 = vmatpush1.msra.mxu0 0.0
        %473 = vmatprep.subr.mxu0 0.0
        %474 = vmatpush1.msra.mxu0 0.0
        %475 = vmatprep.subr.mxu0 0.0
        %476 = vmatpush1.msra.mxu0 0.0
        %477 = vmatprep.subr.mxu0 0.0
        %478 = vmatpush1.msra.mxu0 0.0
        %479 = vmatprep.subr.mxu0 0.0
        %480 = vmatpush1.msra.mxu0 0.0
        %481 = vmatprep.subr.mxu0 0.0
        %482 = vmatpush1.msra.mxu0 0.0
        %483 = vmatprep.subr.mxu0 0.0
        %484 = vmatpush1.msra.mxu0 0.0
        %485 = vmatprep.subr.mxu0 0.0
        %486 = vmatpush1.msra.mxu0 0.0
        %487 = vmatprep.subr.mxu0 0.0
        %488 = vmatpush1.msra.mxu0 0.0
        %489 = vmatprep.subr.mxu0 0.0
        %490 = vmatpush1.msra.mxu0 0.0
        %491 = vmatprep.subr.mxu0 0.0
        %492 = vmatpush1.msra.mxu0 0.0
        %493 = vmatprep.subr.mxu0 0.0
        %494 = vmatpush1.msra.mxu0 0.0
        %495 = vmatprep.subr.mxu0 0.0
        %496 = vmatpush1.msra.mxu0 0.0
        %497 = vmatprep.subr.mxu0 0.0
        %498 = vmatpush1.msra.mxu0 0.0
        %499 = vmatprep.subr.mxu0 0.0
        %500 = vmatpush1.msra.mxu0 0.0
        %501 = vmatprep.subr.mxu0 0.0
        %502 = vmatpush1.msra.mxu0 0.0
        %503 = vmatprep.subr.mxu0 0.0
        %504 = vmatpush1.msra.mxu0 0.0
        %505 = vmatprep.subr.mxu0 0.0
        %506 = vmatpush1.msra.mxu0 0.0
        %507 = vmatprep.subr.mxu0 0.0
        %508 = vmatpush1.msra.mxu0 0.0
        %509 = vmatprep.subr.mxu0 0.0
        %510 = vmatpush1.msra.mxu0 0.0
        %511 = vmatprep.subr.mxu0 0.0
        %512 = vmatpush1.msra.mxu0 0.0
        %513 = vmatprep.subr.mxu0 0.0
        %514 = vmatpush1.msra.mxu0 0.0
        %515 = vmatprep.subr.mxu0 0.0
        %516 = vmatpush1.msra.mxu0 0.0
        %517 = vmatprep.subr.mxu0 0.0
        %518 = vmatpush1.msra.mxu0 0.0
        %519 = vmatprep.subr.mxu0 0.0
        %520 = vmatpush1.msra.mxu0 0.0
        %521 = vmatprep.subr.mxu0 0.0
        %522 = vmatpush1.msra.mxu0 0.0
        %523 = vmatprep.subr.mxu0 0.0
        %524 = vmatpush1.msra.mxu0 0.0
        %525 = vmatprep.mubr.f32.mxu0 0.0
        %526 = vmatmul.mubr.f32.gmra.mrb[0].mxu0 %v456
        %v527 = vpop.f32.mrb[0].mxu0
        %v528 = vadd.f32 %v448, %v527
        %v529 = vpop.f32.mrb[0].mxu0
        %530 = vmatprep.mubr.f32.mxu0 0.0
        %531 = vmatmul.mubr.f32.gmra.mrb[0].mxu0 %v459
        %v532 = vpop.f32.mrb[0].mxu0
        %v533 = vadd.f32 %v453, %v532
        %v534 = vpop.f32.mrb[0].mxu0
        %535 = vdwg.mxu0
        %v537 = vlaneseq
        %v538 = vshrl.u32 %v537, 7
        %v539 = vsub.s32 0, %v538
        %v540 = vrot.slane %v356, %v539
        %v543 = vsel %vm361, %v528, 0
        %v546 = vsel %vm361, %v533, 0
        %vm548 = vcmask 1045504
        %v550 = vsel %vm548, %v355, 0
        %552 = vmatprep.subr.mxu0 0.0
        %553 = vmatpush1.msra.mxu0 %v550
        %554 = vmatprep.subr.mxu0 0.0
        %555 = vmatpush1.msra.mxu0 0.0
        %556 = vmatprep.subr.mxu0 0.0
        %557 = vmatpush1.msra.mxu0 0.0
        %558 = vmatprep.subr.mxu0 0.0
        %559 = vmatpush1.msra.mxu0 0.0
        %560 = vmatprep.subr.mxu0 0.0
        %561 = vmatpush1.msra.mxu0 0.0
        %562 = vmatprep.subr.mxu0 0.0
        %563 = vmatpush1.msra.mxu0 0.0
        %564 = vmatprep.subr.mxu0 0.0
        %565 = vmatpush1.msra.mxu0 0.0
        %566 = vmatprep.subr.mxu0 0.0
        %567 = vmatpush1.msra.mxu0 0.0
        %568 = vmatprep.subr.mxu0 0.0
        %569 = vmatpush1.msra.mxu0 0.0
        %570 = vmatprep.subr.mxu0 0.0
        %571 = vmatpush1.msra.mxu0 0.0
        %572 = vmatprep.subr.mxu0 0.0
        %573 = vmatpush1.msra.mxu0 0.0
        %574 = vmatprep.subr.mxu0 0.0
        %575 = vmatpush1.msra.mxu0 0.0
        %576 = vmatprep.subr.mxu0 0.0
        %577 = vmatpush1.msra.mxu0 0.0
        %578 = vmatprep.subr.mxu0 0.0
        %579 = vmatpush1.msra.mxu0 0.0
        %580 = vmatprep.subr.mxu0 0.0
        %581 = vmatpush1.msra.mxu0 0.0
        %582 = vmatprep.subr.mxu0 0.0
        %583 = vmatpush1.msra.mxu0 0.0
        %584 = vmatprep.subr.mxu0 0.0
        %585 = vmatpush1.msra.mxu0 0.0
        %586 = vmatprep.subr.mxu0 0.0
        %587 = vmatpush1.msra.mxu0 0.0
        %588 = vmatprep.subr.mxu0 0.0
        %589 = vmatpush1.msra.mxu0 0.0
        %590 = vmatprep.subr.mxu0 0.0
        %591 = vmatpush1.msra.mxu0 0.0
        %592 = vmatprep.subr.mxu0 0.0
        %593 = vmatpush1.msra.mxu0 0.0
        %594 = vmatprep.subr.mxu0 0.0
        %595 = vmatpush1.msra.mxu0 0.0
        %596 = vmatprep.subr.mxu0 0.0
        %597 = vmatpush1.msra.mxu0 0.0
        %598 = vmatprep.subr.mxu0 0.0
        %599 = vmatpush1.msra.mxu0 0.0
        %600 = vmatprep.subr.mxu0 0.0
        %601 = vmatpush1.msra.mxu0 0.0
        %602 = vmatprep.subr.mxu0 0.0
        %603 = vmatpush1.msra.mxu0 0.0
        %604 = vmatprep.subr.mxu0 0.0
        %605 = vmatpush1.msra.mxu0 0.0
        %606 = vmatprep.subr.mxu0 0.0
        %607 = vmatpush1.msra.mxu0 0.0
        %608 = vmatprep.subr.mxu0 0.0
        %609 = vmatpush1.msra.mxu0 0.0
        %610 = vmatprep.subr.mxu0 0.0
        %611 = vmatpush1.msra.mxu0 0.0
        %612 = vmatprep.subr.mxu0 0.0
        %613 = vmatpush1.msra.mxu0 0.0
        %614 = vmatprep.subr.mxu0 0.0
        %615 = vmatpush1.msra.mxu0 0.0
        %616 = vmatprep.mubr.f32.mxu0 0.0
        %617 = vmatmul.mubr.f32.gmra.mrb[0].mxu0 %v543
        %v618 = vpop.f32.mrb[0].mxu0
        %v619 = vadd.f32 %v540, %v618
        %v620 = vpop.f32.mrb[0].mxu0
        %621 = vmatprep.mubr.f32.mxu0 0.0
        %622 = vmatmul.mubr.f32.gmra.mrb[0].mxu0 %v546
        %v623 = vpop.f32.mrb[0].mxu0
        %v624 = vadd.f32 %v540, %v623
        %v625 = vpop.f32.mrb[0].mxu0
        %626 = vdwg.mxu0
        %vm627 = vcmask 490496
        %628 = vst.msk [vmem:[%s313] sm:$0xff] %vm627, %v619
        %629 = vst.msk [vmem:[%s320] sm:$0xff] %vm627, %v624
        %s630 = sand.u32 %s149, 1
        %s631 = scalar_lea.sflag [#allocation3], %s630
        %s632 = sand.u32 %s149, 1
        %s633 = smul.addr %s632, 8
        %s634 = scalar_lea.vmem [#allocation2], %s633
        %s635 = sand.u32 %s175, 1
        %s636 = scalar_lea.sflag [#allocation5], %s635
        %s637 = sand.u32 %s175, 1
        %s638 = smul.addr %s637, 8
        %s639 = scalar_lea.vmem [#allocation4], %s638
        %p640 = scmp.lt.s32.totalorder %s26, 2
        %s641 = scalar_select %p640, %s26, 2
        %s642 = smul.addr %s641, 8
        %s643 = scalar_lea.vmem %s7, %s642
        %p644 = scmp.lt.s32.totalorder %s26, 2
        %s645 = scalar_select %p644, %s26, 2
        %s646 = smul.addr %s645, 8
        %s647 = scalar_lea.vmem %s8, %s646
        // Predicated region
        $region41: #{tpu_custom_call.1} parent=39 // pred_check
          %p648 = pneg %p159
        $region42: #{tpu_custom_call.1} parent=39 // pred_check_branch
          %650 = sbr.rel (%p648) target = $region44
        $region43: #{tpu_custom_call.1} parent=39 // pred_region
          %s652 = ssub.s32 128, 128
          %653 = vsyncadd %s631, %s652
          %s654 = smul.addr %s26, 128
          %s655 = scalar_lea.hbm %s5, %s654
          %s657 = sshll.u32 %s634, 4
          %s658 = int_to_ptr.vmem [resolvable:$true] %s657
          %660 = dma.vmem_to_hbm [thread:$0]  %s658, 128, %s655, %s631
        $region44: #{tpu_custom_call.1} parent=39 // pred_fallthru
          _
        // Predicated region
        $region45: #{tpu_custom_call.1} parent=39 // pred_check
          %p661 = pneg %p185
        $region46: #{tpu_custom_call.1} parent=39 // pred_check_branch
          %663 = sbr.rel (%p661) target = $region48
        $region47: #{tpu_custom_call.1} parent=39 // pred_region
          %s665 = ssub.s32 128, 128
          %666 = vsyncadd %s636, %s665
          %s667 = smul.addr %s26, 128
          %s668 = scalar_lea.hbm %s6, %s667
          %s670 = sshll.u32 %s639, 4
          %s671 = int_to_ptr.vmem [resolvable:$true] %s670
          %673 = dma.vmem_to_hbm [thread:$0]  %s671, 128, %s668, %s636
        $region48: #{tpu_custom_call.1} parent=39 // pred_fallthru
          _
        // Predicated region
        $region49: #{tpu_custom_call.1} parent=39 // pred_check
          %p674 = pneg %p211
        $region50: #{tpu_custom_call.1} parent=39 // pred_check_branch
          %676 = sbr.rel (%p674) target = $region52
        $region51: #{tpu_custom_call.1} parent=39 // pred_region
          _
        $region52: #{tpu_custom_call.1} parent=39 // pred_fallthru
          _
        // Predicated region
        $region53: #{tpu_custom_call.1} parent=39 // pred_check
          %p677 = pneg %p237
        $region54: #{tpu_custom_call.1} parent=39 // pred_check_branch
          %679 = sbr.rel (%p677) target = $region56
        $region55: #{tpu_custom_call.1} parent=39 // pred_region
          _
        $region56: #{tpu_custom_call.1} parent=39 // pred_fallthru
          _
      $region40: #{tpu_custom_call.1} parent=5 // pred_fallthru
        _
      %p680 = scmp.le.s32.totalorder 2, %s21
      // Predicated region
      $region57: #{tpu_custom_call.1} parent=5 // pred_check
        %p681 = pneg %p680
      $region58: #{tpu_custom_call.1} parent=5 // pred_check_branch
        %683 = sbr.rel (%p681) target = $region60
      $region59: #{tpu_custom_call.1} parent=5 // pred_region
        %s684 = ssub.s32 %s21, 2
        // Predicated region
        $region61: #{tpu_custom_call.1} parent=59 // pred_check
          %p685 = pneg %p165
        $region62: #{tpu_custom_call.1} parent=59 // pred_check_branch
          %687 = sbr.rel (%p685) target = $region64
        $region63: #{tpu_custom_call.1} parent=59 // pred_region
          %s688 = sand.u32 %s150, 1
          %s689 = scalar_lea.sflag [#allocation3], %s688
          %s690 = sand.u32 %s150, 1
          %s691 = smul.addr %s690, 8
          %s692 = scalar_lea.vmem [#allocation2], %s691
          %693 = dma.done %s689, 128
        $region64: #{tpu_custom_call.1} parent=59 // pred_fallthru
          _
        // Predicated region
        $region65: #{tpu_custom_call.1} parent=59 // pred_check
          %p694 = pneg %p191
        $region66: #{tpu_custom_call.1} parent=59 // pred_check_branch
          %696 = sbr.rel (%p694) target = $region68
        $region67: #{tpu_custom_call.1} parent=59 // pred_region
          %s697 = sand.u32 %s176, 1
          %s698 = scalar_lea.sflag [#allocation5], %s697
          %s699 = sand.u32 %s176, 1
          %s700 = smul.addr %s699, 8
          %s701 = scalar_lea.vmem [#allocation4], %s700
          %702 = dma.done %s698, 128
        $region68: #{tpu_custom_call.1} parent=59 // pred_fallthru
          _
        // Predicated region
        $region69: #{tpu_custom_call.1} parent=59 // pred_check
          %p703 = pneg %p217
        $region70: #{tpu_custom_call.1} parent=59 // pred_check_branch
          %705 = sbr.rel (%p703) target = $region72
        $region71: #{tpu_custom_call.1} parent=59 // pred_region
          %p706 = scmp.lt.s32.totalorder %s27, 2
          %s707 = scalar_select %p706, %s27, 2
          %s708 = smul.addr %s707, 8
          %s709 = scalar_lea.vmem %s7, %s708
        $region72: #{tpu_custom_call.1} parent=59 // pred_fallthru
          _
        // Predicated region
        $region73: #{tpu_custom_call.1} parent=59 // pred_check
          %p710 = pneg %p243
        $region74: #{tpu_custom_call.1} parent=59 // pred_check_branch
          %712 = sbr.rel (%p710) target = $region76
        $region75: #{tpu_custom_call.1} parent=59 // pred_region
          %p713 = scmp.lt.s32.totalorder %s27, 2
          %s714 = scalar_select %p713, %s27, 2
          %s715 = smul.addr %s714, 8
          %s716 = scalar_lea.vmem %s8, %s715
        $region76: #{tpu_custom_call.1} parent=59 // pred_fallthru
          _
      $region60: #{tpu_custom_call.1} parent=5 // pred_fallthru
        _
    $region6: #{tpu_custom_call.1} parent=1 // loop_footer
      %s25 = sadd.s32 1, %s21
    $region7: #{tpu_custom_call.1} parent=1 // loop_footer_branch
      %20 = sbr.rel target = $region3
    $region8: #{tpu_custom_call.1} parent=1 // loop_exit
      _
    %717 = vsyncpa [#allocation3], 1
    %s718 = scalar_lea.sflag [#allocation3], 1
    %719 = vsyncpa %s718, 1
    %720 = vsyncpa [#allocation5], 1
    %s721 = scalar_lea.sflag [#allocation5], 1
    %722 = vsyncpa %s721, 1

</llo_original>
